<compile_context>
chip_gen: v7x
topology: tpu7x:2x2x1
jax: 0.10.0
libtpu: 0.0.40
codegen_flags: <defaults>
</compile_context>

<pallas_src>
import functools

import jax
import jax.numpy as jnp
from jax.experimental import pallas as pl
from jax.experimental.pallas import tpu as pltpu


_TB = 8  # time-queries per grid step (sublane-dense output tile)


def _input_kernel(ts_ref, u_ref, o_ref, *, t_end):
    # ts_ref: VMEM (TB, 1) int32 query times for this grid step
    # u_ref : VMEM (t_end, m) parameter table (resident; same block every step)
    # o_ref : VMEM (TB, m) output rows
    tb = o_ref.shape[0]
    t = ts_ref[...]                                     # (TB, 1) int32
    # PyTorch-style wrap for negative indices (valid for -t_end <= t < 0).
    t = jnp.where(t < 0, t + t_end, t)                  # (TB, 1)

    # One-hot selector: onehot[j, k] = (k == t_j).  Rows whose t is out of
    # [0, t_end) match no column and therefore produce a zero output row,
    # which implements the `t >= t_end -> zeros(m)` branch with no select.
    col = jax.lax.broadcasted_iota(jnp.int32, (tb, t_end), 1)
    onehot = (col == jnp.broadcast_to(t, (tb, t_end))).astype(u_ref.dtype)

    # (TB, t_end) @ (t_end, m) -> (TB, m): gather + mask in one MXU op,
    # stored as a single dense (8, m) tile.
    o_ref[...] = jnp.dot(
        onehot, u_ref[...], preferred_element_type=jnp.float32
    ).astype(o_ref.dtype)


@jax.jit
def input_forward_batched(u, ts):
    """Batched Input.forward: ts is (T,) int32 -> (T, m).

    Row i is u[ts[i], :] if ts[i] < t_end else zeros(m).
    """
    t_end, m = u.shape
    T = ts.shape[0]
    t_pad = ((T + _TB - 1) // _TB) * _TB
    # Pad with t_end (an out-of-range time) -> padded rows are zero.
    ts_p = jnp.pad(ts.astype(jnp.int32), (0, t_pad - T), constant_values=t_end)
    ts_2d = ts_p.reshape(t_pad, 1)
    num_blocks = t_pad // _TB

    out = pl.pallas_call(
        functools.partial(_input_kernel, t_end=t_end),
        out_shape=jax.ShapeDtypeStruct((t_pad, m), u.dtype),
        grid_spec=pl.GridSpec(
            grid=(num_blocks,),
            in_specs=[
                # 8 query times per step, sublane-packed.
                pl.BlockSpec((_TB, 1), lambda i: (i, 0)),
                # Whole (tiny) table; constant block index -> single DMA.
                pl.BlockSpec((t_end, m), lambda i: (0, 0)),
            ],
            out_specs=pl.BlockSpec((_TB, m), lambda i: (i, 0)),
        ),
        compiler_params=pltpu.CompilerParams(
            dimension_semantics=("parallel",)
        ),
    )(ts_2d, u)
    return out[:T]


def input_forward(u, t):
    """Scalar Input.forward(t): returns u[t, :] if t < t_end else zeros(m)."""
    return input_forward_batched(u, jnp.asarray([t], dtype=jnp.int32))[0]


def _ref_forward(u, t):
    t_end, m = u.shape
    if t < t_end:
        return u[t, :]          # numpy-style negative wrap, like PyTorch
    return jnp.zeros((m,), u.dtype)


if __name__ == "__main__":
    # Module hyper-params (consistent with __init__: u has shape (t_end, m)).
    t_end = 8
    m = 32

    # Deterministic parameter init.
    # NOTE: the original code uses std = 0 (all-zero parameter); we use a small
    # nonzero scale so the gather path is actually exercised.
    key = jax.random.PRNGKey(0)
    u = jax.random.normal(key, (t_end, m), dtype=jnp.float32) * 0.02

    # Batched queries: in-range, out-of-range, negative (wraps), and a length
    # that is NOT a multiple of 8 to exercise the padding path.
    ts = jnp.asarray([0, 3, 7, 9, 15, 2, -1, 5, 11, 4], dtype=jnp.int32)
    out_b = jax.block_until_ready(input_forward_batched(u, ts))
    assert out_b.shape == (ts.shape[0], m)
    for i in range(ts.shape[0]):
        expected = _ref_forward(u, int(ts[i]))
        assert jnp.allclose(out_b[i], expected, atol=1e-6), f"row {i} mismatch"

    # Scalar interface (same semantics as the PyTorch forward).
    out_in = jax.block_until_ready(input_forward(u, 3))
    assert out_in.shape == (m,)
    assert jnp.allclose(out_in, u[3, :], atol=1e-6), "in-range gather mismatch"

    out_out = jax.block_until_ready(input_forward(u, t_end + 5))
    assert jnp.allclose(out_out, jnp.zeros((m,), jnp.float32)), \
        "out-of-range must be zero"

    print("KERNEL_OK")
</pallas_src>

<mosaic_0001>
module attributes {stable_mosaic.version = 11 : i64} {
  func.func @_input_kernel(%arg0: i32, %arg1: memref<8x1xi32, #tpu.memory_space<vmem>>, %arg2: memref<8x32xf32, #tpu.memory_space<vmem>>, %arg3: memref<8x32xf32, #tpu.memory_space<vmem>>) attributes {dimension_semantics = [#tpu.dimension_semantics<parallel>], iteration_bounds = array<i64: 2>, scalar_prefetch = 0 : i64, scratch_operands = 0 : i64, tpu.core_type = #tpu.core_type<tc>, window_params = [{transform_indices = @transform_0, window_bounds = array<i64: 8, 1>}, {pipeline_mode = #tpu.pipeline_mode<synchronous>, transform_indices = @transform_1, window_bounds = array<i64: 8, 32>}, {transform_indices = @transform_2, window_bounds = array<i64: 8, 32>}]} {
    %c0 = arith.constant 0 : index
    %c0_0 = arith.constant 0 : index
    %0 = vector.load %arg1[%c0, %c0_0] : memref<8x1xi32, #tpu.memory_space<vmem>>, vector<8x1xi32>
    %c0_i32 = arith.constant 0 : i32
    %1 = vector.broadcast %c0_i32 : i32 to vector<8x1xi32>
    %2 = arith.cmpi slt, %0, %1 : vector<8x1xi32>
    %c8_i32 = arith.constant 8 : i32
    %3 = vector.broadcast %c8_i32 : i32 to vector<8x1xi32>
    %4 = arith.addi %0, %3 : vector<8x1xi32>
    %5 = arith.select %2, %4, %0 : vector<8x1xi1>, vector<8x1xi32>
    %6 = tpu.iota {dimensions = array<i32: 1>} : vector<8x8xi32>
    %7 = vector.shape_cast %5 : vector<8x1xi32> to vector<8x1xi32>
    %8 = vector.broadcast %7 : vector<8x1xi32> to vector<8x8xi32>
    %9 = arith.cmpi eq, %6, %8 : vector<8x8xi32>
    %10 = arith.extui %9 : vector<8x8xi1> to vector<8x8xi32>
    %11 = arith.sitofp %10 : vector<8x8xi32> to vector<8x8xf32>
    %c0_1 = arith.constant 0 : index
    %c0_2 = arith.constant 0 : index
    %12 = vector.load %arg2[%c0_1, %c0_2] : memref<8x32xf32, #tpu.memory_space<vmem>>, vector<8x32xf32>
    %cst = arith.constant dense<0.000000e+00> : vector<8x32xf32>
    %13 = tpu.matmul %11, %12, %cst {dimension_numbers = #tpu.dot_dimension_numbers<[1], [0], [0], [1], [0, 0, 1, 1], [], []>} : vector<8x8xf32>, vector<8x32xf32>, vector<8x32xf32> -> vector<8x32xf32>
    %c0_3 = arith.constant 0 : index
    %c0_4 = arith.constant 0 : index
    %14 = vector.load %arg3[%c0_3, %c0_4] : memref<8x32xf32, #tpu.memory_space<vmem>>, vector<8x32xf32>
    tpu.vector_store %arg3[%c0_3, %c0_4], %13 {strides = array<i32>} : memref<8x32xf32, #tpu.memory_space<vmem>>, vector<8x32xf32>,
    return
  }
  func.func @transform_0(%arg0: i32) -> (i32, i32) {
    %c0_i32 = arith.constant 0 : i32
    %c0_i32_0 = arith.constant 0 : i32
    return %arg0, %c0_i32 : i32, i32
  }
  func.func @transform_1(%arg0: i32) -> (i32, i32) {
    %c0_i32 = arith.constant 0 : i32
    %c0_i32_0 = arith.constant 0 : i32
    %c0_i32_1 = arith.constant 0 : i32
    return %c0_i32, %c0_i32_0 : i32, i32
  }
  func.func @transform_2(%arg0: i32) -> (i32, i32) {
    %c0_i32 = arith.constant 0 : i32
    %c0_i32_0 = arith.constant 0 : i32
    return %arg0, %c0_i32 : i32, i32
  }
}

</mosaic_0001>

<llo_original>
// kernel: input_forward_batched.1
$region0: #{input_forward_batched.1}
  #allocation0 [shape = 'u32[]', space=smem, size = 0x4, offset = 0x4, fixed_abs, tag = 'smem constant byte address 0x4 - core index']
  #allocation1 [shape = 'u32[144,128]{1,0:T(1,128)}', space=vmem, size = 0x12000, scoped, tag = 'internal scratch']
  %s0 = inlined_call_operand.vmem [shape: s32[16,1], index: 0, kind: input, shape index: {}]
  %s1 = inlined_call_operand.vmem [shape: f32[8,32], index: 1, kind: input, shape index: {}]
  %s2 = inlined_call_operand.hbm [shape: f32[16,32], index: 2, kind: output, shape index: {}]
  %s3 = sld [smem:[#allocation0]]
  $region41: #{input_forward_batched.1} parent=0
    _
  %s5 = ssub.s32 1, %s3
  %s6 = scalar_select 0, %s5, %s3
  $region1: #{input_forward_batched.1} parent=0
    #allocation2 [shape = 'u8[8192]{0}', space=vmem, size = 0x2000, scoped, tag = 'output window, operand 0']
    #allocation3 [shape = 's32[2]{0}', space=sflag, size = 0x8, scoped, tag = 'scoped memory for input_forward_batched.1']
    %7 = vsyncpa [#allocation3], 0
    %s8 = scalar_lea.sflag [#allocation3], 1
    %9 = vsyncpa %s8, 0
    loop: start=0, step=1, limit=4
    $region2: #{input_forward_batched.1} parent=1 // loop_pre_header
      _
    $region3: #{input_forward_batched.1} parent=1 // loop_header
      %s11 = sphi 0, %s15
      %p12 = scmp.ge.s32.totalorder %s11, 4
      %s21 = sphi 0, %s23
      %s24 = sphi 0, %s21
      %s25 = sphi 0, %s24
      %s41 = sphi 0, %s25
      %s45 = sphi 0, %s45
      %s47 = sphi 0, %s45
      %s48 = sphi 0, %s47
      %s62 = sphi 0, %s48
      %s68 = sphi 0, %s70
      %s71 = sphi 0, %s68
      %s72 = sphi 0, %s71
      %s88 = sphi 0, %s72
    $region4: #{input_forward_batched.1} parent=1 // loop_header_branch
      %14 = sbr.rel (%p12) target = $region8
    $region5: #{input_forward_batched.1} parent=1 // loop_body
      %s16 = ssub.s32 %s11, 1
      %s17 = ssub.s32 %s11, 2
      %s18 = sadd.s32 %s11, 1
      %s19 = ssub.s32 %s11, %s18
      %p20 = scmp.eq.s32.totalorder %s19, 0
      %s22 = sadd.s32 %s21, 1
      %s23 = scalar_select %p20, %s21, %s22
      %p26 = pneg %p20
      %p27 = scmp.eq.s32.totalorder %s11, 1
      %p28 = por %p26, %p27
      %p29 = scmp.ne.s32.totalorder %s21, %s24
      %p30 = scmp.eq.s32.totalorder %s11, 0
      %p31 = por %p29, %p30
      %p32 = scmp.ne.s32.totalorder %s21, %s24
      %p33 = scmp.eq.s32.totalorder %s16, 1
      %p34 = por %p32, %p33
      %p35 = scmp.ne.s32.totalorder %s24, %s25
      %p36 = scmp.eq.s32.totalorder %s16, 0
      %p37 = por %p35, %p36
      %p38 = scmp.ne.s32.totalorder %s24, %s25
      %p39 = scmp.eq.s32.totalorder %s17, 1
      %p40 = por %p38, %p39
      %p42 = scmp.ne.s32.totalorder %s25, %s41
      %p43 = scmp.eq.s32.totalorder %s17, 0
      %p44 = por %p42, %p43
      %s46 = sadd.s32 %s45, 1
      %p49 = scmp.eq.s32.totalorder %s11, 1
      %p50 = scmp.ne.s32.totalorder %s45, %s47
      %p51 = scmp.eq.s32.totalorder %s11, 0
      %p52 = por %p50, %p51
      %p53 = scmp.ne.s32.totalorder %s45, %s47
      %p54 = scmp.eq.s32.totalorder %s16, 1
      %p55 = por %p53, %p54
      %p56 = scmp.ne.s32.totalorder %s47, %s48
      %p57 = scmp.eq.s32.totalorder %s16, 0
      %p58 = por %p56, %p57
      %p59 = scmp.ne.s32.totalorder %s47, %s48
      %p60 = scmp.eq.s32.totalorder %s17, 1
      %p61 = por %p59, %p60
      %p63 = scmp.ne.s32.totalorder %s48, %s62
      %p64 = scmp.eq.s32.totalorder %s17, 0
      %p65 = por %p63, %p64
      %s66 = ssub.s32 %s11, %s18
      %p67 = scmp.eq.s32.totalorder %s66, 0
      %s69 = sadd.s32 %s68, 1
      %s70 = scalar_select %p67, %s68, %s69
      %p73 = pneg %p67
      %p74 = scmp.eq.s32.totalorder %s11, 1
      %p75 = por %p73, %p74
      %p76 = scmp.ne.s32.totalorder %s68, %s71
      %p77 = scmp.eq.s32.totalorder %s11, 0
      %p78 = por %p76, %p77
      %p79 = scmp.ne.s32.totalorder %s68, %s71
      %p80 = scmp.eq.s32.totalorder %s16, 1
      %p81 = por %p79, %p80
      %p82 = scmp.ne.s32.totalorder %s71, %s72
      %p83 = scmp.eq.s32.totalorder %s16, 0
      %p84 = por %p82, %p83
      %p85 = scmp.ne.s32.totalorder %s71, %s72
      %p86 = scmp.eq.s32.totalorder %s17, 1
      %p87 = por %p85, %p86
      %p89 = scmp.ne.s32.totalorder %s72, %s88
      %p90 = scmp.eq.s32.totalorder %s17, 0
      %p91 = por %p89, %p90
      %p92 = scmp.le.s32.totalorder 1, %s11
      %p93 = scmp.lt.s32.totalorder %s11, 3
      %p94 = pnand %p92, %p93
      %p95 = pneg %p94
      // Predicated region
      $region9: #{input_forward_batched.1} parent=5 // pred_check
        _
      $region10: #{input_forward_batched.1} parent=5 // pred_check_branch
        %97 = sbr.rel (%p94) target = $region12
      $region11: #{input_forward_batched.1} parent=5 // pred_region
        %s98 = ssub.s32 %s11, 1
        // Predicated region
        $region13: #{input_forward_batched.1} parent=11 // pred_check
          %p99 = pneg %p58
        $region14: #{input_forward_batched.1} parent=11 // pred_check_branch
          %101 = sbr.rel (%p99) target = $region16
        $region15: #{input_forward_batched.1} parent=11 // pred_region
          _
        $region16: #{input_forward_batched.1} parent=11 // pred_fallthru
          _
      $region12: #{input_forward_batched.1} parent=5 // pred_fallthru
        _
      %p102 = scmp.lt.s32.totalorder %s11, 2
      // Predicated region
      $region17: #{input_forward_batched.1} parent=5 // pred_check
        %p103 = pneg %p102
      $region18: #{input_forward_batched.1} parent=5 // pred_check_branch
        %105 = sbr.rel (%p103) target = $region20
      $region19: #{input_forward_batched.1} parent=5 // pred_region
        // Predicated region
        $region21: #{input_forward_batched.1} parent=19 // pred_check
          %p106 = pneg %p31
        $region22: #{input_forward_batched.1} parent=19 // pred_check_branch
          %108 = sbr.rel (%p106) target = $region24
        $region23: #{input_forward_batched.1} parent=19 // pred_region
          %p109 = scmp.lt.s32.totalorder %s11, 1
          %s110 = scalar_select %p109, %s11, 1
          %s111 = smul.addr %s110, 8
          %s112 = scalar_lea.vmem %s0, %s111
        $region24: #{input_forward_batched.1} parent=19 // pred_fallthru
          _
      $region20: #{input_forward_batched.1} parent=5 // pred_fallthru
        _
      %p113 = scmp.le.s32.totalorder 1, %s11
      %p114 = scmp.lt.s32.totalorder %s11, 3
      %p115 = pnand %p113, %p114
      %p116 = pneg %p115
      // Predicated region
      $region25: #{input_forward_batched.1} parent=5 // pred_check
        _
      $region26: #{input_forward_batched.1} parent=5 // pred_check_branch
        %118 = sbr.rel (%p115) target = $region28
      $region27: #{input_forward_batched.1} parent=5 // pred_region
        %s119 = ssub.s32 %s11, 1
        %p120 = scmp.lt.s32.totalorder %s16, 1
        %s121 = scalar_select %p120, %s16, 1
        %s122 = smul.addr %s121, 8
        %s123 = scalar_lea.vmem %s0, %s122
        %p124 = pneg %p37
        %p125 = pneg %p34
        %p126 = pneg %p58
        %p127 = pneg %p55
        %p128 = pneg %p84
        %p129 = pneg %p81
        %s130 = sand.u32 %s71, 1
        %s131 = scalar_lea.sflag [#allocation3], %s130
        %s132 = sand.u32 %s71, 1
        %s133 = smul.addr %s132, 8
        %s134 = scalar_lea.vmem [#allocation2], %s133
        %p135 = scmp.lt.s32.totalorder %s16, 1
        %s136 = scalar_select %p135, %s16, 1
        %s137 = smul.addr %s136, 8
        %s138 = scalar_lea.vmem %s0, %s137
        %v139 = vld [vmem:[%s138] sm:$0xff]
        %vm140 = vcmp.lt.s32.totalorder %v139, 0
        %v141 = vadd.s32 %v139, 8
        %v142 = vsel %vm140, %v141, %v139
        %v143 = vlaneseq
        %v144 = vand.u32 %v143, 127
        %145 = vset.pattern.permute.xlu0 0
        %146 = vperm.xlu0 %145, %v142
        %v147 = vpop.permute.xlu0 %146
        %vm148 = vcmp.eq.s32.totalorder %v144, %v147
        %v149 = vsel %vm148, 1, 0
        %v150 = vcvt.s32.f32 %v149
        %v151 = vld [vmem:[%s1] sm:$0xff]
        %vm152 = vcmask 64512
        %v154 = vsel %vm152, %v150, 0
        %156 = vmatprep.subr.mxu0 0.0
        %157 = vmatpush1.msra.mxu0 %v151
        %158 = vmatprep.subr.mxu0 0.0
        %159 = vmatpush1.msra.mxu0 0.0
        %160 = vmatprep.subr.mxu0 0.0
        %161 = vmatpush1.msra.mxu0 0.0
        %162 = vmatprep.subr.mxu0 0.0
        %163 = vmatpush1.msra.mxu0 0.0
        %164 = vmatprep.subr.mxu0 0.0
        %165 = vmatpush1.msra.mxu0 0.0
        %166 = vmatprep.subr.mxu0 0.0
        %167 = vmatpush1.msra.mxu0 0.0
        %168 = vmatprep.subr.mxu0 0.0
        %169 = vmatpush1.msra.mxu0 0.0
        %170 = vmatprep.subr.mxu0 0.0
        %171 = vmatpush1.msra.mxu0 0.0
        %172 = vmatprep.subr.mxu0 0.0
        %173 = vmatpush1.msra.mxu0 0.0
        %174 = vmatprep.subr.mxu0 0.0
        %175 = vmatpush1.msra.mxu0 0.0
        %176 = vmatprep.subr.mxu0 0.0
        %177 = vmatpush1.msra.mxu0 0.0
        %178 = vmatprep.subr.mxu0 0.0
        %179 = vmatpush1.msra.mxu0 0.0
        %180 = vmatprep.subr.mxu0 0.0
        %181 = vmatpush1.msra.mxu0 0.0
        %182 = vmatprep.subr.mxu0 0.0
        %183 = vmatpush1.msra.mxu0 0.0
        %184 = vmatprep.subr.mxu0 0.0
        %185 = vmatpush1.msra.mxu0 0.0
        %186 = vmatprep.subr.mxu0 0.0
        %187 = vmatpush1.msra.mxu0 0.0
        %188 = vmatprep.subr.mxu0 0.0
        %189 = vmatpush1.msra.mxu0 0.0
        %190 = vmatprep.subr.mxu0 0.0
        %191 = vmatpush1.msra.mxu0 0.0
        %192 = vmatprep.subr.mxu0 0.0
        %193 = vmatpush1.msra.mxu0 0.0
        %194 = vmatprep.subr.mxu0 0.0
        %195 = vmatpush1.msra.mxu0 0.0
        %196 = vmatprep.subr.mxu0 0.0
        %197 = vmatpush1.msra.mxu0 0.0
        %198 = vmatprep.subr.mxu0 0.0
        %199 = vmatpush1.msra.mxu0 0.0
        %200 = vmatprep.subr.mxu0 0.0
        %201 = vmatpush1.msra.mxu0 0.0
        %202 = vmatprep.subr.mxu0 0.0
        %203 = vmatpush1.msra.mxu0 0.0
        %204 = vmatprep.subr.mxu0 0.0
        %205 = vmatpush1.msra.mxu0 0.0
        %206 = vmatprep.subr.mxu0 0.0
        %207 = vmatpush1.msra.mxu0 0.0
        %208 = vmatprep.subr.mxu0 0.0
        %209 = vmatpush1.msra.mxu0 0.0
        %210 = vmatprep.subr.mxu0 0.0
        %211 = vmatpush1.msra.mxu0 0.0
        %212 = vmatprep.subr.mxu0 0.0
        %213 = vmatpush1.msra.mxu0 0.0
        %214 = vmatprep.subr.mxu0 0.0
        %215 = vmatpush1.msra.mxu0 0.0
        %216 = vmatprep.subr.mxu0 0.0
        %217 = vmatpush1.msra.mxu0 0.0
        %218 = vmatprep.subr.mxu0 0.0
        %219 = vmatpush1.msra.mxu0 0.0
        %220 = vmatprep.mubr.f32.mxu0 0.0
        %221 = vmatmul.mubr.f32.gmra.mrb[0].mxu0 %v154
        %v222 = vpop.f32.mrb[0].mxu0
        %v223 = vadd.f32 0.0, %v222
        %v224 = vpop.f32.mrb[0].mxu0
        %225 = vdwg.mxu0
        %vm226 = vcmask 261120
        %227 = vst.msk [vmem:[%s134] sm:$0xff] %vm226, %v223
        %s228 = sand.u32 %s71, 1
        %s229 = scalar_lea.sflag [#allocation3], %s228
        %s230 = sand.u32 %s71, 1
        %s231 = smul.addr %s230, 8
        %s232 = scalar_lea.vmem [#allocation2], %s231
        // Predicated region
        $region29: #{input_forward_batched.1} parent=27 // pred_check
          %p233 = pneg %p81
        $region30: #{input_forward_batched.1} parent=27 // pred_check_branch
          %235 = sbr.rel (%p233) target = $region32
        $region31: #{input_forward_batched.1} parent=27 // pred_region
          %s237 = ssub.s32 128, 128
          %238 = vsyncadd %s229, %s237
          %s239 = smul.addr %s16, 128
          %s240 = scalar_lea.hbm %s2, %s239
          %s242 = sshll.u32 %s232, 4
          %s243 = int_to_ptr.vmem [resolvable:$true] %s242
          %245 = dma.vmem_to_hbm [thread:$0]  %s243, 128, %s240, %s229
        $region32: #{input_forward_batched.1} parent=27 // pred_fallthru
          _
      $region28: #{input_forward_batched.1} parent=5 // pred_fallthru
        _
      %p246 = scmp.le.s32.totalorder 2, %s11
      // Predicated region
      $region33: #{input_forward_batched.1} parent=5 // pred_check
        %p247 = pneg %p246
      $region34: #{input_forward_batched.1} parent=5 // pred_check_branch
        %249 = sbr.rel (%p247) target = $region36
      $region35: #{input_forward_batched.1} parent=5 // pred_region
        %s250 = ssub.s32 %s11, 2
        // Predicated region
        $region37: #{input_forward_batched.1} parent=35 // pred_check
          %p251 = pneg %p87
        $region38: #{input_forward_batched.1} parent=35 // pred_check_branch
          %253 = sbr.rel (%p251) target = $region40
        $region39: #{input_forward_batched.1} parent=35 // pred_region
          %s254 = sand.u32 %s72, 1
          %s255 = scalar_lea.sflag [#allocation3], %s254
          %s256 = sand.u32 %s72, 1
          %s257 = smul.addr %s256, 8
          %s258 = scalar_lea.vmem [#allocation2], %s257
          %259 = dma.done %s255, 128
        $region40: #{input_forward_batched.1} parent=35 // pred_fallthru
          _
      $region36: #{input_forward_batched.1} parent=5 // pred_fallthru
        _
    $region6: #{input_forward_batched.1} parent=1 // loop_footer
      %s15 = sadd.s32 1, %s11
    $region7: #{input_forward_batched.1} parent=1 // loop_footer_branch
      %10 = sbr.rel target = $region3
    $region8: #{input_forward_batched.1} parent=1 // loop_exit
      _
    %260 = vsyncpa [#allocation3], 1
    %s261 = scalar_lea.sflag [#allocation3], 1
    %262 = vsyncpa %s261, 1

</llo_original>
